<compile_context>
chip_gen: v7x
topology: tpu7x:2x2x1
jax: 0.10.0
libtpu: 0.0.40
codegen_flags: <defaults>
</compile_context>

<pallas_src>
import functools

import jax
import jax.numpy as jnp
from jax.experimental import pallas as pl
from jax.experimental.pallas import tpu as pltpu


def _contrastive_loss_kernel(d_ref, y_ref, out_ref, *, margin, n_rows, tile_n,
                             tiles_per_par, first_masked_tile, total_steps):
    c = pl.program_id(0)          # "parallel" slice (maps to a TensorCore on v7x)
    t = pl.program_id(1)          # sequential reduction axis within the slice

    @pl.when(t == 0)
    def _init():
        out_ref[...] = jnp.zeros_like(out_ref)

    # Upcast in-kernel; all arithmetic in f32. 0.5 factors folded into the final scale.
    d = d_ref[...].astype(jnp.float32)
    y = y_ref[...].astype(jnp.float32)
    dm = jnp.maximum(margin - d, 0.0)
    vals = d * d * y + (1.0 - y) * (dm * dm)

    def _accumulate(v):
        # Sublane-axis reduce -> lane-dense (1, F) partial; accumulate into the
        # per-slice output block. Final cross-lane reduce happens once, outside.
        out_ref[...] += jnp.sum(v, axis=0, keepdims=True)[None]

    if first_masked_tile < total_steps:
        gt = c * tiles_per_par + t          # global tile index

        @pl.when(gt < first_masked_tile)
        def _steady():
            _accumulate(vals)

        @pl.when(gt >= first_masked_tile)
        def _edge():
            # Only the last real (partial) tile and any padding steps reach here.
            row = jax.lax.broadcasted_iota(jnp.int32, (vals.shape[0], 1), 0)
            valid = (gt * tile_n + row) < n_rows
            _accumulate(jnp.where(valid, vals, 0.0))
    else:
        _accumulate(vals)


def contrastive_loss(distances, labels, margin=100.0, tile_n=None):
    assert distances.shape == labels.shape
    assert distances.ndim == 2, "expected [N, F] distances/labels"
    n, f = distances.shape

    d_item = distances.dtype.itemsize
    y_item = labels.dtype.itemsize

    # ---- hardware-aware VMEM budget (handles v7x's 64 MiB per-TC VMEM) ----
    try:
        info = pltpu.get_tpu_info()
        vmem_cap = int(getattr(info, "vmem_capacity_bytes", 64 << 20))
    except Exception:
        vmem_cap = 64 << 20          # conservative fallback: works on every generation

    # Steady-state per-row bytes: double-buffered native-dtype inputs + ~6 f32 temporaries
    # from the upcast elementwise chain.
    bytes_per_row = f * (2 * (d_item + y_item) + 6 * 4)
    vmem_budget = min(int(vmem_cap * 0.4), 48 << 20)

    if tile_n is None:
        tile_n = max(32, (vmem_budget // bytes_per_row) // 32 * 32)   # 32-row aligned
    if tile_n >= n:
        tile_n = n                        # single full block (any N allowed)
    else:
        tile_n = max(8, (tile_n // 8) * 8)

    num_tiles = pl.cdiv(n, tile_n)
    num_par = 2 if num_tiles >= 2 else 1                 # leading "parallel" axis
    tiles_per_par = pl.cdiv(num_tiles, num_par)
    total_steps = num_par * tiles_per_par                # may exceed num_tiles by <= 1
    # Tiles at/after this global index need masking (partial last tile and/or padding).
    first_masked_tile = num_tiles - 1 if (n % tile_n) != 0 else num_tiles

    def _in_index(c, t):
        # Clamp padding steps onto the last real block; they are fully masked in-kernel.
        return (jnp.minimum(c * tiles_per_par + t, num_tiles - 1), 0)

    kernel = functools.partial(
        _contrastive_loss_kernel,
        margin=float(margin),
        n_rows=n,
        tile_n=tile_n,
        tiles_per_par=tiles_per_par,
        first_masked_tile=first_masked_tile,
        total_steps=total_steps,
    )

    # VMEM limit: double-buffered inputs + f32 temporaries + margin, capped below physical.
    io_bytes = 2 * tile_n * f * (d_item + y_item)
    tmp_bytes = 6 * tile_n * f * 4
    vmem_limit = int(min(max(io_bytes + tmp_bytes + (8 << 20), 32 << 20),
                         (vmem_cap * 3) // 4))

    bytes_in = distances.size * d_item + labels.size * y_item
    cost = pl.CostEstimate(
        flops=8 * n * f,
        transcendentals=0,
        bytes_accessed=bytes_in + num_par * f * 4,
    )

    partials = pl.pallas_call(
        kernel,
        out_shape=jax.ShapeDtypeStruct((num_par, 1, f), jnp.float32),
        grid_spec=pltpu.PrefetchScalarGridSpec(
            num_scalar_prefetch=0,
            grid=(num_par, tiles_per_par),
            in_specs=[
                pl.BlockSpec((tile_n, f), _in_index),
                pl.BlockSpec((tile_n, f), _in_index),
            ],
            # One lane-dense accumulator block per parallel slice; constant across t.
            out_specs=pl.BlockSpec((1, 1, f), lambda c, t: (c, 0, 0)),
        ),
        compiler_params=pltpu.CompilerParams(
            dimension_semantics=("parallel", "arbitrary"),
            vmem_limit_bytes=vmem_limit,
        ),
        cost_estimate=cost,
    )(distances, labels)     # native dtypes; upcast happens inside the kernel

    # Tiny final reduction + scale (0.5 folded here); matches `loss / (len(A)*len(A))`.
    return jnp.sum(partials) * jnp.float32(0.5 / float(n * n))


def contrastive_loss_ref(distances, labels, margin=100.0):
    d = distances.astype(jnp.float32)
    y = labels.astype(jnp.float32)
    a = 0.5 * d * d * y
    dm = jnp.maximum(margin - d, 0.0)
    b = 0.5 * (1.0 - y) * dm * dm
    n = distances.shape[0]
    return jnp.sum(a + b) / (n * n)


if __name__ == "__main__":
    key = jax.random.PRNGKey(0)
    k1, k2, k3, k4, k5, k6 = jax.random.split(key, 6)

    # Case 1: 3 full tiles -> 2-D (parallel, arbitrary) grid with one fully-masked
    # padding step on the second parallel slice.
    N, F = 96, 128
    d1 = jax.random.uniform(k1, (N, F), dtype=jnp.float32) * 150.0
    y1 = (jax.random.uniform(k2, (N, F)) > 0.5).astype(jnp.float32)
    out1 = jax.block_until_ready(contrastive_loss(d1, y1, margin=100.0, tile_n=32))
    ref1 = contrastive_loss_ref(d1, y1, margin=100.0)
    assert jnp.allclose(out1, ref1, rtol=1e-4, atol=1e-4), (out1, ref1)

    # Case 2: N % tile_n != 0 -> partial last tile + padding step, both masked.
    N2, F2 = 20, 128
    d2 = jax.random.uniform(k3, (N2, F2), dtype=jnp.float32) * 150.0
    y2 = (jax.random.uniform(k4, (N2, F2)) > 0.5).astype(jnp.float32)
    out2 = jax.block_until_ready(contrastive_loss(d2, y2, margin=100.0, tile_n=8))
    ref2 = contrastive_loss_ref(d2, y2, margin=100.0)
    assert jnp.allclose(out2, ref2, rtol=1e-4, atol=1e-4), (out2, ref2)

    # Case 3: default auto-tile path (single full block), bf16 distances / int8 labels.
    N3, F3 = 64, 256
    d3 = (jax.random.uniform(k5, (N3, F3), dtype=jnp.float32) * 150.0).astype(jnp.bfloat16)
    y3 = (jax.random.uniform(k6, (N3, F3)) > 0.5).astype(jnp.int8)
    out3 = jax.block_until_ready(contrastive_loss(d3, y3, margin=100.0))
    ref3 = contrastive_loss_ref(d3, y3, margin=100.0)
    assert jnp.allclose(out3, ref3, rtol=5e-3, atol=5e-3), (out3, ref3)

    print("KERNEL_OK")
</pallas_src>

<mosaic_0001>
module attributes {stable_mosaic.version = 11 : i64} {
  func.func @_contrastive_loss_kernel(%arg0: i32, %arg1: i32, %arg2: memref<32x128xf32, #tpu.memory_space<vmem>>, %arg3: memref<32x128xf32, #tpu.memory_space<vmem>>, %arg4: memref<1x1x128xf32, #tpu.memory_space<vmem>>) attributes {dimension_semantics = [#tpu.dimension_semantics<parallel>, #tpu.dimension_semantics<arbitrary>], iteration_bounds = array<i64: 2, 2>, scalar_prefetch = 0 : i64, scratch_operands = 0 : i64, tpu.core_type = #tpu.core_type<tc>, window_params = [{transform_indices = @transform_0, window_bounds = array<i64: 32, 128>}, {transform_indices = @transform_1, window_bounds = array<i64: 32, 128>}, {transform_indices = @transform_2, window_bounds = array<i64: 1, 1, 128>}]} {
    %c0_i32 = arith.constant 0 : i32
    %0 = arith.cmpi eq, %arg1, %c0_i32 : i32
    %1 = arith.extui %0 : i1 to i32
    %c0_i32_0 = arith.constant 0 : i32
    %2 = arith.cmpi ne, %1, %c0_i32_0 : i32
    scf.if %2 {
      %cst_9 = arith.constant 0.000000e+00 : f32
      %24 = vector.broadcast %cst_9 : f32 to vector<1x1x128xf32>
      %c0_10 = arith.constant 0 : index
      %c0_11 = arith.constant 0 : index
      %c0_12 = arith.constant 0 : index
      %25 = vector.load %arg4[%c0_10, %c0_11, %c0_12] : memref<1x1x128xf32, #tpu.memory_space<vmem>>, vector<1x1x128xf32>
      tpu.vector_store %arg4[%c0_10, %c0_11, %c0_12], %24 {strides = array<i32>} : memref<1x1x128xf32, #tpu.memory_space<vmem>>, vector<1x1x128xf32>,
    } else {
    }
    %c0 = arith.constant 0 : index
    %c0_1 = arith.constant 0 : index
    %3 = vector.load %arg2[%c0, %c0_1] : memref<32x128xf32, #tpu.memory_space<vmem>>, vector<32x128xf32>
    %c0_2 = arith.constant 0 : index
    %c0_3 = arith.constant 0 : index
    %4 = vector.load %arg3[%c0_2, %c0_3] : memref<32x128xf32, #tpu.memory_space<vmem>>, vector<32x128xf32>
    %cst = arith.constant 1.000000e+02 : f32
    %5 = vector.broadcast %cst : f32 to vector<32x128xf32>
    %6 = arith.subf %5, %3 : vector<32x128xf32>
    %cst_4 = arith.constant 0.000000e+00 : f32
    %7 = vector.broadcast %cst_4 : f32 to vector<32x128xf32>
    %8 = arith.maximumf %6, %7 : vector<32x128xf32>
    %9 = arith.mulf %3, %3 : vector<32x128xf32>
    %10 = arith.mulf %9, %4 : vector<32x128xf32>
    %cst_5 = arith.constant 1.000000e+00 : f32
    %11 = vector.broadcast %cst_5 : f32 to vector<32x128xf32>
    %12 = arith.subf %11, %4 : vector<32x128xf32>
    %13 = arith.mulf %8, %8 : vector<32x128xf32>
    %14 = arith.mulf %12, %13 : vector<32x128xf32>
    %15 = arith.addf %10, %14 : vector<32x128xf32>
    %c2_i32 = arith.constant 2 : i32
    %16 = arith.muli %arg0, %c2_i32 : i32
    %17 = arith.addi %16, %arg1 : i32
    %c3_i32 = arith.constant 3 : i32
    %18 = arith.cmpi slt, %17, %c3_i32 : i32
    %19 = arith.extui %18 : i1 to i32
    %c0_i32_6 = arith.constant 0 : i32
    %20 = arith.cmpi ne, %19, %c0_i32_6 : i32
    scf.if %20 {
      %c0_9 = arith.constant 0 : index
      %c0_10 = arith.constant 0 : index
      %c0_11 = arith.constant 0 : index
      %24 = vector.load %arg4[%c0_9, %c0_10, %c0_11] : memref<1x1x128xf32, #tpu.memory_space<vmem>>, vector<1x1x128xf32>
      %cst_12 = arith.constant dense<0.000000e+00> : vector<128xf32>
      %25 = vector.multi_reduction <add>, %15, %cst_12 [0] : vector<32x128xf32> to vector<128xf32>
      %26 = vector.shape_cast %25 : vector<128xf32> to vector<1x128xf32>
      %27 = vector.shape_cast %26 : vector<1x128xf32> to vector<1x1x128xf32>
      %28 = arith.addf %24, %27 : vector<1x1x128xf32>
      %c0_13 = arith.constant 0 : index
      %c0_14 = arith.constant 0 : index
      %c0_15 = arith.constant 0 : index
      %29 = vector.load %arg4[%c0_13, %c0_14, %c0_15] : memref<1x1x128xf32, #tpu.memory_space<vmem>>, vector<1x1x128xf32>
      tpu.vector_store %arg4[%c0_13, %c0_14, %c0_15], %28 {strides = array<i32>} : memref<1x1x128xf32, #tpu.memory_space<vmem>>, vector<1x1x128xf32>,
    } else {
    }
    %c3_i32_7 = arith.constant 3 : i32
    %21 = arith.cmpi sge, %17, %c3_i32_7 : i32
    %22 = arith.extui %21 : i1 to i32
    %c0_i32_8 = arith.constant 0 : i32
    %23 = arith.cmpi ne, %22, %c0_i32_8 : i32
    scf.if %23 {
      %24 = tpu.iota {dimensions = array<i32: 0>} : vector<32x1xi32>
      %c32_i32 = arith.constant 32 : i32
      %25 = arith.muli %17, %c32_i32 : i32
      %26 = vector.broadcast %25 : i32 to vector<32x1xi32>
      %27 = arith.addi %26, %24 : vector<32x1xi32>
      %c96_i32 = arith.constant 96 : i32
      %28 = vector.broadcast %c96_i32 : i32 to vector<32x1xi32>
      %29 = arith.cmpi slt, %27, %28 : vector<32x1xi32>
      %cst_9 = arith.constant 0.000000e+00 : f32
      %30 = vector.shape_cast %29 : vector<32x1xi1> to vector<32x1xi1>
      %31 = vector.broadcast %30 : vector<32x1xi1> to vector<32x128xi1>
      %32 = vector.broadcast %cst_9 : f32 to vector<32x128xf32>
      %33 = arith.select %31, %15, %32 : vector<32x128xi1>, vector<32x128xf32>
      %c0_10 = arith.constant 0 : index
      %c0_11 = arith.constant 0 : index
      %c0_12 = arith.constant 0 : index
      %34 = vector.load %arg4[%c0_10, %c0_11, %c0_12] : memref<1x1x128xf32, #tpu.memory_space<vmem>>, vector<1x1x128xf32>
      %cst_13 = arith.constant dense<0.000000e+00> : vector<128xf32>
      %35 = vector.multi_reduction <add>, %33, %cst_13 [0] : vector<32x128xf32> to vector<128xf32>
      %36 = vector.shape_cast %35 : vector<128xf32> to vector<1x128xf32>
      %37 = vector.shape_cast %36 : vector<1x128xf32> to vector<1x1x128xf32>
      %38 = arith.addf %34, %37 : vector<1x1x128xf32>
      %c0_14 = arith.constant 0 : index
      %c0_15 = arith.constant 0 : index
      %c0_16 = arith.constant 0 : index
      %39 = vector.load %arg4[%c0_14, %c0_15, %c0_16] : memref<1x1x128xf32, #tpu.memory_space<vmem>>, vector<1x1x128xf32>
      tpu.vector_store %arg4[%c0_14, %c0_15, %c0_16], %38 {strides = array<i32>} : memref<1x1x128xf32, #tpu.memory_space<vmem>>, vector<1x1x128xf32>,
    } else {
    }
    return
  }
  func.func @transform_0(%arg0: i32, %arg1: i32) -> (i32, i32) {
    %c2_i32 = arith.constant 2 : i32
    %0 = arith.muli %arg0, %c2_i32 : i32
    %1 = arith.addi %0, %arg1 : i32
    %c2_i32_0 = arith.constant 2 : i32
    %2 = arith.minsi %1, %c2_i32_0 : i32
    %c0_i32 = arith.constant 0 : i32
    %c0_i32_1 = arith.constant 0 : i32
    return %2, %c0_i32 : i32, i32
  }
  func.func @transform_1(%arg0: i32, %arg1: i32) -> (i32, i32) {
    %c2_i32 = arith.constant 2 : i32
    %0 = arith.muli %arg0, %c2_i32 : i32
    %1 = arith.addi %0, %arg1 : i32
    %c2_i32_0 = arith.constant 2 : i32
    %2 = arith.minsi %1, %c2_i32_0 : i32
    %c0_i32 = arith.constant 0 : i32
    %c0_i32_1 = arith.constant 0 : i32
    return %2, %c0_i32 : i32, i32
  }
  func.func @transform_2(%arg0: i32, %arg1: i32) -> (i32, i32, i32) {
    %c0_i32 = arith.constant 0 : i32
    %c0_i32_0 = arith.constant 0 : i32
    %c0_i32_1 = arith.constant 0 : i32
    return %arg0, %c0_i32, %c0_i32_0 : i32, i32, i32
  }
}

</mosaic_0001>

<llo_original>
// kernel: tpu_custom_call.1
$region0: #{tpu_custom_call.1}
  #allocation0 [shape = 'u32[]', space=smem, size = 0x4, offset = 0x4, fixed_abs, tag = 'smem constant byte address 0x4 - core index']
  #allocation1 [shape = 'u32[144,128]{1,0:T(1,128)}', space=vmem, size = 0x12000, scoped, tag = 'internal scratch']
  %s0 = inlined_call_operand.hbm [shape: f32[96,128], index: 0, kind: input, shape index: {}]
  %s1 = inlined_call_operand.hbm [shape: f32[96,128], index: 1, kind: input, shape index: {}]
  %s2 = inlined_call_operand.hbm [shape: f32[2,1,128], index: 2, kind: output, shape index: {}]
  %s3 = sld [smem:[#allocation0]]
  $region61: #{tpu_custom_call.1} parent=0
    _
  %s5 = ssub.s32 1, %s3
  %s6 = scalar_select 0, %s5, %s3
  $region1: #{tpu_custom_call.1} parent=0
    #allocation2 [shape = 'u8[32768]{0}', space=vmem, size = 0x8000, scoped, tag = 'input window, operand 0']
    #allocation3 [shape = 's32[2]{0}', space=sflag, size = 0x8, scoped, tag = 'scoped memory for tpu_custom_call.1']
    #allocation4 [shape = 's32[2]{0}', space=sflag, size = 0x8, scoped, tag = 'scoped memory for tpu_custom_call.1']
    #allocation5 [shape = 'u8[32768]{0}', space=vmem, size = 0x8000, scoped, tag = 'input window, operand 1']
    #allocation6 [shape = 's32[2]{0}', space=sflag, size = 0x8, scoped, tag = 'scoped memory for tpu_custom_call.1']
    #allocation7 [shape = 'u8[1024]{0}', space=vmem, size = 0x400, scoped, tag = 'output window, operand 0']
    %7 = vsyncpa [#allocation3], 0
    %s8 = scalar_lea.sflag [#allocation3], 1
    %9 = vsyncpa %s8, 0
    %10 = vsyncpa [#allocation6], 0
    %s11 = scalar_lea.sflag [#allocation6], 1
    %12 = vsyncpa %s11, 0
    %13 = vsyncpa [#allocation4], 0
    %s14 = scalar_lea.sflag [#allocation4], 1
    %15 = vsyncpa %s14, 0
    loop: start=0, step=1, limit=6
    $region2: #{tpu_custom_call.1} parent=1 // loop_pre_header
      _
    $region3: #{tpu_custom_call.1} parent=1 // loop_header
      %s17 = sphi 0, %s21
      %p18 = scmp.ge.s32.totalorder %s17, 6
      %s24 = sphi 0, %s36
      %s25 = sphi 0, %s32
      %s26 = sphi 0, %s24
      %s27 = sphi 0, %s25
      %s28 = sphi 0, %s26
      %s29 = sphi 0, %s27
      %s47 = sphi 0, %s49
      %s50 = sphi 0, %s47
      %s51 = sphi 0, %s50
      %s67 = sphi 0, %s51
      %s81 = sphi 0, %s83
      %s84 = sphi 0, %s81
      %s85 = sphi 0, %s84
      %s101 = sphi 0, %s85
      %s107 = sphi 0, %s109
      %s110 = sphi 0, %s107
      %s111 = sphi 0, %s110
      %s127 = sphi 0, %s111
    $region4: #{tpu_custom_call.1} parent=1 // loop_header_branch
      %20 = sbr.rel (%p18) target = $region8
    $region5: #{tpu_custom_call.1} parent=1 // loop_body
      %s22 = ssub.s32 %s17, 1
      %s23 = ssub.s32 %s17, 2
      %s30 = sadd.s32 1, %s25
      %p31 = scmp.ge.s32.totalorder %s30, 2
      %s32 = scalar_select %p31, 0, %s30
      %s33 = sadd.s32 1, %s24
      %s34 = scalar_select %p31, %s33, %s24
      %p35 = scmp.ge.s32.totalorder %s34, 2
      %s36 = scalar_select %p35, 0, %s34
      %s37 = smul.u32 %s24, 2
      %s38 = sadd.s32 %s37, %s25
      %p39 = scmp.lt.s32.totalorder %s38, 2
      %s40 = scalar_select %p39, %s38, 2
      %s41 = smul.u32 %s36, 2
      %s42 = sadd.s32 %s41, %s32
      %p43 = scmp.lt.s32.totalorder %s42, 2
      %s44 = scalar_select %p43, %s42, 2
      %s45 = ssub.s32 %s40, %s44
      %p46 = scmp.eq.s32.totalorder %s45, 0
      %s48 = sadd.s32 %s47, 1
      %s49 = scalar_select %p46, %s47, %s48
      %p52 = pneg %p46
      %p53 = scmp.eq.s32.totalorder %s17, 3
      %p54 = por %p52, %p53
      %p55 = scmp.ne.s32.totalorder %s47, %s50
      %p56 = scmp.eq.s32.totalorder %s17, 0
      %p57 = por %p55, %p56
      %p58 = scmp.ne.s32.totalorder %s47, %s50
      %p59 = scmp.eq.s32.totalorder %s22, 3
      %p60 = por %p58, %p59
      %p61 = scmp.ne.s32.totalorder %s50, %s51
      %p62 = scmp.eq.s32.totalorder %s22, 0
      %p63 = por %p61, %p62
      %p64 = scmp.ne.s32.totalorder %s50, %s51
      %p65 = scmp.eq.s32.totalorder %s23, 3
      %p66 = por %p64, %p65
      %p68 = scmp.ne.s32.totalorder %s51, %s67
      %p69 = scmp.eq.s32.totalorder %s23, 0
      %p70 = por %p68, %p69
      %s71 = smul.u32 %s24, 2
      %s72 = sadd.s32 %s71, %s25
      %p73 = scmp.lt.s32.totalorder %s72, 2
      %s74 = scalar_select %p73, %s72, 2
      %s75 = smul.u32 %s36, 2
      %s76 = sadd.s32 %s75, %s32
      %p77 = scmp.lt.s32.totalorder %s76, 2
      %s78 = scalar_select %p77, %s76, 2
      %s79 = ssub.s32 %s74, %s78
      %p80 = scmp.eq.s32.totalorder %s79, 0
      %s82 = sadd.s32 %s81, 1
      %s83 = scalar_select %p80, %s81, %s82
      %p86 = pneg %p80
      %p87 = scmp.eq.s32.totalorder %s17, 3
      %p88 = por %p86, %p87
      %p89 = scmp.ne.s32.totalorder %s81, %s84
      %p90 = scmp.eq.s32.totalorder %s17, 0
      %p91 = por %p89, %p90
      %p92 = scmp.ne.s32.totalorder %s81, %s84
      %p93 = scmp.eq.s32.totalorder %s22, 3
      %p94 = por %p92, %p93
      %p95 = scmp.ne.s32.totalorder %s84, %s85
      %p96 = scmp.eq.s32.totalorder %s22, 0
      %p97 = por %p95, %p96
      %p98 = scmp.ne.s32.totalorder %s84, %s85
      %p99 = scmp.eq.s32.totalorder %s23, 3
      %p100 = por %p98, %p99
      %p102 = scmp.ne.s32.totalorder %s85, %s101
      %p103 = scmp.eq.s32.totalorder %s23, 0
      %p104 = por %p102, %p103
      %s105 = ssub.s32 %s24, %s36
      %p106 = scmp.eq.s32.totalorder %s105, 0
      %s108 = sadd.s32 %s107, 1
      %s109 = scalar_select %p106, %s107, %s108
      %p112 = pneg %p106
      %p113 = scmp.eq.s32.totalorder %s17, 3
      %p114 = por %p112, %p113
      %p115 = scmp.ne.s32.totalorder %s107, %s110
      %p116 = scmp.eq.s32.totalorder %s17, 0
      %p117 = por %p115, %p116
      %p118 = scmp.ne.s32.totalorder %s107, %s110
      %p119 = scmp.eq.s32.totalorder %s22, 3
      %p120 = por %p118, %p119
      %p121 = scmp.ne.s32.totalorder %s110, %s111
      %p122 = scmp.eq.s32.totalorder %s22, 0
      %p123 = por %p121, %p122
      %p124 = scmp.ne.s32.totalorder %s110, %s111
      %p125 = scmp.eq.s32.totalorder %s23, 3
      %p126 = por %p124, %p125
      %p128 = scmp.ne.s32.totalorder %s111, %s127
      %p129 = scmp.eq.s32.totalorder %s23, 0
      %p130 = por %p128, %p129
      %p131 = scmp.le.s32.totalorder 1, %s17
      %p132 = scmp.lt.s32.totalorder %s17, 5
      %p133 = pnand %p131, %p132
      %p134 = pneg %p133
      // Predicated region
      $region9: #{tpu_custom_call.1} parent=5 // pred_check
        _
      $region10: #{tpu_custom_call.1} parent=5 // pred_check_branch
        %136 = sbr.rel (%p133) target = $region12
      $region11: #{tpu_custom_call.1} parent=5 // pred_region
        %s137 = ssub.s32 %s17, 1
      $region12: #{tpu_custom_call.1} parent=5 // pred_fallthru
        _
      %p138 = scmp.lt.s32.totalorder %s17, 4
      // Predicated region
      $region13: #{tpu_custom_call.1} parent=5 // pred_check
        %p139 = pneg %p138
      $region14: #{tpu_custom_call.1} parent=5 // pred_check_branch
        %141 = sbr.rel (%p139) target = $region16
      $region15: #{tpu_custom_call.1} parent=5 // pred_region
        // Predicated region
        $region17: #{tpu_custom_call.1} parent=15 // pred_check
          %p142 = pneg %p57
        $region18: #{tpu_custom_call.1} parent=15 // pred_check_branch
          %144 = sbr.rel (%p142) target = $region20
        $region19: #{tpu_custom_call.1} parent=15 // pred_region
          %s145 = sand.u32 %s47, 1
          %s146 = scalar_lea.sflag [#allocation3], %s145
          %s147 = sand.u32 %s47, 1
          %s148 = smul.addr %s147, 32
          %s149 = scalar_lea.vmem [#allocation2], %s148
          %s150 = smul.u32 %s24, 2
          %s151 = sadd.s32 %s150, %s25
          %p152 = scmp.lt.s32.totalorder %s151, 2
          %s153 = scalar_select %p152, %s151, 2
          %s154 = smul.u32 4, %s153
          %s156 = ssub.s32 512, 512
          %157 = vsyncadd %s146, %s156
          %s158 = smul.addr %s154, 128
          %s159 = scalar_lea.hbm %s0, %s158
          %s160 = sshll.u32 %s149, 4
          %s161 = int_to_ptr.vmem [resolvable:$true] %s160
          %166 = dma.hbm_to_vmem [thread:$0]  %s159, 512, %s161, %s146, 128, 128, 8
        $region20: #{tpu_custom_call.1} parent=15 // pred_fallthru
          _
        // Predicated region
        $region21: #{tpu_custom_call.1} parent=15 // pred_check
          %p167 = pneg %p91
        $region22: #{tpu_custom_call.1} parent=15 // pred_check_branch
          %169 = sbr.rel (%p167) target = $region24
        $region23: #{tpu_custom_call.1} parent=15 // pred_region
          %s170 = sand.u32 %s81, 1
          %s171 = scalar_lea.sflag [#allocation6], %s170
          %s172 = sand.u32 %s81, 1
          %s173 = smul.addr %s172, 32
          %s174 = scalar_lea.vmem [#allocation5], %s173
          %s175 = smul.u32 %s24, 2
          %s176 = sadd.s32 %s175, %s25
          %p177 = scmp.lt.s32.totalorder %s176, 2
          %s178 = scalar_select %p177, %s176, 2
          %s179 = smul.u32 4, %s178
          %s181 = ssub.s32 512, 512
          %182 = vsyncadd %s171, %s181
          %s183 = smul.addr %s179, 128
          %s184 = scalar_lea.hbm %s1, %s183
          %s185 = sshll.u32 %s174, 4
          %s186 = int_to_ptr.vmem [resolvable:$true] %s185
          %191 = dma.hbm_to_vmem [thread:$0]  %s184, 512, %s186, %s171, 128, 128, 8
        $region24: #{tpu_custom_call.1} parent=15 // pred_fallthru
          _
      $region16: #{tpu_custom_call.1} parent=5 // pred_fallthru
        _
      %p192 = scmp.le.s32.totalorder 1, %s17
      %p193 = scmp.lt.s32.totalorder %s17, 5
      %p194 = pnand %p192, %p193
      %p195 = pneg %p194
      // Predicated region
      $region25: #{tpu_custom_call.1} parent=5 // pred_check
        _
      $region26: #{tpu_custom_call.1} parent=5 // pred_check_branch
        %197 = sbr.rel (%p194) target = $region28
      $region27: #{tpu_custom_call.1} parent=5 // pred_region
        %s198 = ssub.s32 %s17, 1
        %s199 = sand.u32 %s50, 1
        %s200 = scalar_lea.sflag [#allocation3], %s199
        %s201 = sand.u32 %s50, 1
        %s202 = smul.addr %s201, 32
        %s203 = scalar_lea.vmem [#allocation2], %s202
        // Predicated region
        $region29: #{tpu_custom_call.1} parent=27 // pred_check
          %p204 = pneg %p63
        $region30: #{tpu_custom_call.1} parent=27 // pred_check_branch
          %206 = sbr.rel (%p204) target = $region32
        $region31: #{tpu_custom_call.1} parent=27 // pred_region
          %207 = dma.done %s200, 512
        $region32: #{tpu_custom_call.1} parent=27 // pred_fallthru
          _
        %s208 = sand.u32 %s84, 1
        %s209 = scalar_lea.sflag [#allocation6], %s208
        %s210 = sand.u32 %s84, 1
        %s211 = smul.addr %s210, 32
        %s212 = scalar_lea.vmem [#allocation5], %s211
        // Predicated region
        $region33: #{tpu_custom_call.1} parent=27 // pred_check
          %p213 = pneg %p97
        $region34: #{tpu_custom_call.1} parent=27 // pred_check_branch
          %215 = sbr.rel (%p213) target = $region36
        $region35: #{tpu_custom_call.1} parent=27 // pred_region
          %216 = dma.done %s209, 512
        $region36: #{tpu_custom_call.1} parent=27 // pred_fallthru
          _
        %s217 = sand.u32 %s50, 1
        %s218 = scalar_lea.sflag [#allocation3], %s217
        %s219 = sand.u32 %s50, 1
        %s220 = smul.addr %s219, 32
        %s221 = scalar_lea.vmem [#allocation2], %s220
        %p222 = pneg %p63
        %p223 = pneg %p60
        %s224 = sand.u32 %s84, 1
        %s225 = scalar_lea.sflag [#allocation6], %s224
        %s226 = sand.u32 %s84, 1
        %s227 = smul.addr %s226, 32
        %s228 = scalar_lea.vmem [#allocation5], %s227
        %p229 = pneg %p97
        %p230 = pneg %p94
        %p231 = pneg %p123
        %p232 = pneg %p120
        %s233 = sand.u32 %s110, 1
        %s234 = scalar_lea.sflag [#allocation4], %s233
        %s235 = sand.u32 %s110, 1
        %s236 = scalar_lea.vmem [#allocation7], %s235
        %s237 = smul.u32 %s26, 2
        %s238 = sadd.s32 %s237, %s27
        %p239 = scmp.lt.s32.totalorder %s238, 2
        %s240 = scalar_select %p239, %s238, 2
        %s241 = smul.u32 4, %s240
        %s242 = smul.u32 %s26, 2
        %s243 = sadd.s32 %s242, %s27
        %p244 = scmp.lt.s32.totalorder %s243, 2
        %s245 = scalar_select %p244, %s243, 2
        %s246 = smul.u32 4, %s245
        %p247 = scmp.eq.s32.totalorder %s27, 0
        // Predicated region
        $region37: #{tpu_custom_call.1} parent=27 // pred_check
          %p248 = pneg %p247
        $region38: #{tpu_custom_call.1} parent=27 // pred_check_branch
          %250 = sbr.rel (%p248) target = $region40
        $region39: #{tpu_custom_call.1} parent=27 // pred_region
          %251 = vst [vmem:[%s236] sm:$0x1] 0.0
        $region40: #{tpu_custom_call.1} parent=27 // pred_fallthru
          _
        %v252 = vld [vmem:[%s203] sm:$0xff]
        %v253 = vld [vmem:[%s203 + $0x8] sm:$0xff]
        %v254 = vld [vmem:[%s203 + $0x10] sm:$0xff]
        %v255 = vld [vmem:[%s203 + $0x18] sm:$0xff]
        %v256 = vld [vmem:[%s212] sm:$0xff]
        %v257 = vld [vmem:[%s212 + $0x8] sm:$0xff]
        %v258 = vld [vmem:[%s212 + $0x10] sm:$0xff]
        %v259 = vld [vmem:[%s212 + $0x18] sm:$0xff]
        %v260 = vsub.f32 100.0, %v252
        %v261 = vsub.f32 100.0, %v253
        %v262 = vsub.f32 100.0, %v254
        %v263 = vsub.f32 100.0, %v255
        %v264 = vmax.f32 %v260, 0.0
        %v265 = vmax.f32 %v261, 0.0
        %v266 = vmax.f32 %v262, 0.0
        %v267 = vmax.f32 %v263, 0.0
        %v268 = vmul.f32 %v252, %v252
        %v269 = vmul.f32 %v253, %v253
        %v270 = vmul.f32 %v254, %v254
        %v271 = vmul.f32 %v255, %v255
        %v272 = vmul.f32 %v268, %v256
        %v273 = vmul.f32 %v269, %v257
        %v274 = vmul.f32 %v270, %v258
        %v275 = vmul.f32 %v271, %v259
        %v276 = vsub.f32 1.0, %v256
        %v277 = vsub.f32 1.0, %v257
        %v278 = vsub.f32 1.0, %v258
        %v279 = vsub.f32 1.0, %v259
        %v280 = vmul.f32 %v264, %v264
        %v281 = vmul.f32 %v265, %v265
        %v282 = vmul.f32 %v266, %v266
        %v283 = vmul.f32 %v267, %v267
        %v284 = vmul.f32 %v276, %v280
        %v285 = vmul.f32 %v277, %v281
        %v286 = vmul.f32 %v278, %v282
        %v287 = vmul.f32 %v279, %v283
        %v288 = vadd.f32 %v272, %v284
        %v289 = vadd.f32 %v273, %v285
        %v290 = vadd.f32 %v274, %v286
        %v291 = vadd.f32 %v275, %v287
        %s292 = smul.u32 %s26, 2
        %s293 = sadd.s32 %s292, %s27
        %p294 = scmp.lt.s32.totalorder %s293, 3
        // Predicated region
        $region41: #{tpu_custom_call.1} parent=27 // pred_check
          %p295 = pneg %p294
        $region42: #{tpu_custom_call.1} parent=27 // pred_check_branch
          %297 = sbr.rel (%p295) target = $region44
        $region43: #{tpu_custom_call.1} parent=27 // pred_region
          %v298 = vld [vmem:[%s236] sm:$0x1]
          %v299 = vadd.f32 %v288, %v289
          %v300 = vadd.f32 %v299, %v290
          %v301 = vadd.f32 %v300, %v291
          %v302 = vrot.slane %v301, 4
          %v303 = vadd.f32 %v301, %v302
          %v304 = vrot.slane %v303, 2
          %v305 = vadd.f32 %v303, %v304
          %v306 = vrot.slane %v305, 1
          %v307 = vadd.f32 %v305, %v306
          %v308 = vadd.f32 %v298, %v307
          %309 = vst [vmem:[%s236] sm:$0x1] %v308
        $region44: #{tpu_custom_call.1} parent=27 // pred_fallthru
          _
        %p310 = scmp.ge.s32.totalorder %s293, 3
        // Predicated region
        $region45: #{tpu_custom_call.1} parent=27 // pred_check
          %p311 = pneg %p310
        $region46: #{tpu_custom_call.1} parent=27 // pred_check_branch
          %313 = sbr.rel (%p311) target = $region48
        $region47: #{tpu_custom_call.1} parent=27 // pred_region
          %v314 = vlaneseq
          %v315 = vshrl.u32 %v314, 7
          %v316 = vadd.s32 %v315, 8
          %v317 = vadd.s32 %v315, 16
          %v318 = vadd.s32 %v315, 24
          %s319 = smul.u32 %s293, 32
          %v320 = vstv %s319
          %v321 = vadd.s32 %v320, %v315
          %v322 = vadd.s32 %v320, %v316
          %v323 = vadd.s32 %v320, %v317
          %v324 = vadd.s32 %v320, %v318
          %vm325 = vcmp.lt.s32.totalorder %v321, 96
          %vm326 = vcmp.lt.s32.totalorder %v322, 96
          %vm327 = vcmp.lt.s32.totalorder %v323, 96
          %vm328 = vcmp.lt.s32.totalorder %v324, 96
          %v329 = vsel %vm325, 1, 0
          %v330 = vsel %vm326, 1, 0
          %v331 = vsel %vm327, 1, 0
          %v332 = vsel %vm328, 1, 0
          %vm333 = vcmp.eq.s32.totalorder %v329, 1
          %vm334 = vcmp.eq.s32.totalorder %v330, 1
          %vm335 = vcmp.eq.s32.totalorder %v331, 1
          %vm336 = vcmp.eq.s32.totalorder %v332, 1
          %v337 = vsel %vm333, %v288, 0.0
          %v338 = vsel %vm334, %v289, 0.0
          %v339 = vsel %vm335, %v290, 0.0
          %v340 = vsel %vm336, %v291, 0.0
          %v341 = vld [vmem:[%s236] sm:$0x1]
          %v342 = vadd.f32 %v337, %v338
          %v343 = vadd.f32 %v342, %v339
          %v344 = vadd.f32 %v343, %v340
          %v345 = vrot.slane %v344, 4
          %v346 = vadd.f32 %v344, %v345
          %v347 = vrot.slane %v346, 2
          %v348 = vadd.f32 %v346, %v347
          %v349 = vrot.slane %v348, 1
          %v350 = vadd.f32 %v348, %v349
          %v351 = vadd.f32 %v341, %v350
          %352 = vst [vmem:[%s236] sm:$0x1] %v351
        $region48: #{tpu_custom_call.1} parent=27 // pred_fallthru
          _
        %s353 = sand.u32 %s110, 1
        %s354 = scalar_lea.sflag [#allocation4], %s353
        %s355 = sand.u32 %s110, 1
        %s356 = scalar_lea.vmem [#allocation7], %s355
        // Predicated region
        $region49: #{tpu_custom_call.1} parent=27 // pred_check
          %p357 = pneg %p120
        $region50: #{tpu_custom_call.1} parent=27 // pred_check_branch
          %359 = sbr.rel (%p357) target = $region52
        $region51: #{tpu_custom_call.1} parent=27 // pred_region
          %s361 = ssub.s32 16, 16
          %362 = vsyncadd %s354, %s361
          %s363 = smul.addr %s26, 16
          %s364 = scalar_lea.hbm %s2, %s363
          %s366 = sshll.u32 %s356, 4
          %s367 = int_to_ptr.vmem [resolvable:$true] %s366
          %369 = dma.vmem_to_hbm [thread:$0]  %s367, 16, %s364, %s354
        $region52: #{tpu_custom_call.1} parent=27 // pred_fallthru
          _
      $region28: #{tpu_custom_call.1} parent=5 // pred_fallthru
        _
      %p370 = scmp.le.s32.totalorder 2, %s17
      // Predicated region
      $region53: #{tpu_custom_call.1} parent=5 // pred_check
        %p371 = pneg %p370
      $region54: #{tpu_custom_call.1} parent=5 // pred_check_branch
        %373 = sbr.rel (%p371) target = $region56
      $region55: #{tpu_custom_call.1} parent=5 // pred_region
        %s374 = ssub.s32 %s17, 2
        // Predicated region
        $region57: #{tpu_custom_call.1} parent=55 // pred_check
          %p375 = pneg %p126
        $region58: #{tpu_custom_call.1} parent=55 // pred_check_branch
          %377 = sbr.rel (%p375) target = $region60
        $region59: #{tpu_custom_call.1} parent=55 // pred_region
          %s378 = sand.u32 %s111, 1
          %s379 = scalar_lea.sflag [#allocation4], %s378
          %s380 = sand.u32 %s111, 1
          %s381 = scalar_lea.vmem [#allocation7], %s380
          %382 = dma.done %s379, 16
        $region60: #{tpu_custom_call.1} parent=55 // pred_fallthru
          _
      $region56: #{tpu_custom_call.1} parent=5 // pred_fallthru
        _
    $region6: #{tpu_custom_call.1} parent=1 // loop_footer
      %s21 = sadd.s32 1, %s17
    $region7: #{tpu_custom_call.1} parent=1 // loop_footer_branch
      %16 = sbr.rel target = $region3
    $region8: #{tpu_custom_call.1} parent=1 // loop_exit
      _
    %383 = vsyncpa [#allocation3], 1
    %s384 = scalar_lea.sflag [#allocation3], 1
    %385 = vsyncpa %s384, 1
    %386 = vsyncpa [#allocation6], 1
    %s387 = scalar_lea.sflag [#allocation6], 1
    %388 = vsyncpa %s387, 1
    %389 = vsyncpa [#allocation4], 1
    %s390 = scalar_lea.sflag [#allocation4], 1
    %391 = vsyncpa %s390, 1

</llo_original>
